<compile_context>
chip_gen: v7x
topology: tpu7x:2x2x1
jax: 0.10.0
libtpu: 0.0.40
codegen_flags: <defaults>
</compile_context>

<pallas_src>
import functools
import math

import jax
import jax.numpy as jnp
from jax.experimental import pallas as pl
from jax.experimental.pallas import tpu as pltpu


def _bn_fold(gamma, beta, mean, var, eps=1e-5):
    scale = gamma / jnp.sqrt(var + eps)
    return scale, beta - mean * scale


def _round_up(a, b):
    return -(-a // b) * b


def _st_gcn_kernel(nb, Kt, x_ref, wc_ref, wt_ref, bias_ref, o_ref, hpad_ref):
    """One batch-block of the fused st_gcn forward.

    Row axis of every block is (t, n_inner) with n_inner of size nb (multiple of 8);
    lane axis is (c, v) on the input and (c_out, v) on h / the output.

      x_ref    (Rb, C_in*V)            bf16  raw input rows
      wc_ref   (C_in*V, 2*OV)          bf16  [gcn·A·BN1 | residual-conv·BN_res] fused weights
      wt_ref   (OV, Kt*OV)             bf16  temporal taps (channel mix per tap, BN2 folded)
      bias_ref (2, OV)                 f32   row0: gcn/BN1 bias, row1: residual+BN_res+tcn+BN2
      o_ref    (Rb, OV)                bf16  output rows
      hpad_ref (Rb + 2*pad*nb, OV)     bf16  VMEM scratch: temporally zero-padded h
    """
    OV = o_ref.shape[-1]
    Rb = x_ref.shape[0]
    pad = (Kt - 1) // 2
    hb = pad * nb                      # rows of temporal zero-padding (one t step = nb rows)

    # --- stage 1: gcn (1x1 conv + graph aggregation + BN1) and residual conv (+BN_res)
    #     in a single MXU push; biases added in f32, BN1 + ReLU applied to the gcn half.
    pre = jnp.dot(x_ref[...], wc_ref[...], preferred_element_type=jnp.float32)
    h = jnp.maximum(pre[:, :OV] + bias_ref[0:1, :], 0.0)
    tc = pre[:, OV:] + bias_ref[1:2, :]          # residual branch + all remaining folded biases

    # --- stage 2: temporal conv.  h goes into a zero-padded VMEM scratch; every tap is an
    #     8-aligned row window (shift by whole t steps = nb rows) feeding one small matmul.
    #     The scratch's zero head/tail implements the temporal zero padding exactly, and
    #     because shifts move whole t-slabs, samples never contaminate each other.
    if hb > 0:
        hpad_ref[0:hb, :] = jnp.zeros((hb, OV), hpad_ref.dtype)
        hpad_ref[pl.ds(hb + Rb, hb), :] = jnp.zeros((hb, OV), hpad_ref.dtype)
    hpad_ref[pl.ds(hb, Rb), :] = h.astype(hpad_ref.dtype)

    for dt in range(Kt):
        win = hpad_ref[pl.ds(dt * nb, Rb), :]
        tc = tc + jnp.dot(win, wt_ref[:, dt * OV:(dt + 1) * OV],
                          preferred_element_type=jnp.float32)

    # --- residual already folded into tc; final ReLU, bf16 writeback.
    o_ref[...] = jnp.maximum(tc, 0.0).astype(o_ref.dtype)


def st_gcn_forward(x, A, p, *, Kt=3):
    """x: (N, C_in, T, V), A: (K, V, V) -> (N, C_out, T, V).  Inference-mode forward."""
    N, C_in, T, V = x.shape
    K = A.shape[0]
    C_out = p["W_tcn"].shape[1]
    CV, OV = C_in * V, C_out * V

    # ---- fold the three BatchNorms (inference mode) into the adjacent convolutions ----
    s1, b1 = _bn_fold(p["bn1_gamma"], p["bn1_beta"], p["bn1_mean"], p["bn1_var"])
    s2, b2 = _bn_fold(p["bn2_gamma"], p["bn2_beta"], p["bn2_mean"], p["bn2_var"])
    sr, br = _bn_fold(p["bnr_gamma"], p["bnr_beta"], p["bnr_mean"], p["bnr_var"])

    eyeV = jnp.eye(V, dtype=jnp.float32)

    # gcn 1x1 conv + spatial aggregation + BN1 scale folded into ONE (C_in*V, C_out*V) matrix:
    #   Bfull[(c,v),(o,w)] = s1[o] * sum_k W_gcn[k,o,c] * A[k,v,w]
    Wg = p["W_gcn"].reshape(K, C_out, C_in)
    Bfull = (jnp.einsum('koc,kvw->cvow', Wg, A) * s1[None, None, :, None]).reshape(CV, OV)
    # residual 1x1 conv + BN_res scale:  Rmat[(c,v),(o,w)] = sr[o] * W_res[o,c] * delta(v,w)
    Rmat = jnp.einsum('oc,vw->cvow', p["W_res"] * sr[:, None], eyeV).reshape(CV, OV)
    wc = jnp.concatenate([Bfull, Rmat], axis=1)                       # (CV, 2*OV)

    # temporal taps (channel mix at fixed graph node) with BN2 scale folded:
    #   wt[(o',w'), dt*OV + o*V + w] = s2[o] * W_tcn[dt, o, o'] * delta(w', w)
    Wt_s = p["W_tcn"] * s2[None, :, None]
    wt = jnp.einsum('doi,vw->ivdow', Wt_s, eyeV).reshape(OV, Kt * OV)

    # bias rows, kept in f32 and added post-matmul inside the kernel:
    bg = p["b_gcn"].reshape(K, C_out)
    acs = A.sum(axis=1)                                               # column sums of A_k
    gcn_bias = (s1[:, None] * jnp.einsum('ko,kw->ow', bg, acs) + b1[:, None]).reshape(OV)
    res_bias = jnp.broadcast_to(
        ((sr * p["b_res"] + br) + (s2 * p["b_tcn"] + b2))[:, None], (C_out, V)).reshape(OV)
    biases = jnp.stack([gcn_bias, res_bias], axis=0).astype(jnp.float32)   # (2, OV)

    # ---- batch blocking: rows = (t, n_inner), nb multiple of 8 so every temporal shift
    #      (one t step = nb rows) is an 8-aligned VMEM window. ----
    TARGET_ROWS = 2048      # ~7 MiB VMEM peak per block: fits v5e's 16 MiB scoped default,
                            # well under v7x's 64 MiB physical VMEM, big enough to amortize
                            # the ~0.35 us per-grid-step overhead.
    nb_cap = max(8, ((TARGET_ROWS // T) // 8) * 8)
    if N > nb_cap:
        nb = nb_cap
    else:
        n_blocks = 2 if N >= 16 else 1     # >=2 blocks when worthwhile (v7x: 2 TensorCores)
        nb = _round_up(-(-N // n_blocks), 8)
    n_pad = _round_up(N, nb)               # pad whole samples (no divisor search, no tail mask)
    n_blk = n_pad // nb
    Rb = nb * T

    x_p = jnp.pad(x, ((0, n_pad - N), (0, 0), (0, 0), (0, 0))) if n_pad > N else x
    # (block, t, n_inner) row order, (c, v) lanes; bf16 activations (f32 accumulation in-kernel)
    x2d = (x_p.reshape(n_blk, nb, C_in, T, V)
              .transpose(0, 3, 1, 2, 4)
              .reshape(n_pad * T, CV)
              .astype(jnp.bfloat16))
    wc = wc.astype(jnp.bfloat16)
    wt = wt.astype(jnp.bfloat16)

    pad_t = (Kt - 1) // 2
    kernel = functools.partial(_st_gcn_kernel, nb, Kt)
    out2d = pl.pallas_call(
        kernel,
        out_shape=jax.ShapeDtypeStruct((n_pad * T, OV), jnp.bfloat16),
        grid=(n_blk,),
        in_specs=[
            pl.BlockSpec((Rb, CV), lambda i: (i, 0)),        # raw activations (no expansion)
            pl.BlockSpec((CV, 2 * OV), lambda i: (0, 0)),    # fused gcn+residual weights
            pl.BlockSpec((OV, Kt * OV), lambda i: (0, 0)),   # temporal taps
            pl.BlockSpec((2, OV), lambda i: (0, 0)),         # f32 bias rows
        ],
        out_specs=pl.BlockSpec((Rb, OV), lambda i: (i, 0)),
        scratch_shapes=[pltpu.VMEM((Rb + 2 * pad_t * nb, OV), jnp.bfloat16)],
        compiler_params=pltpu.CompilerParams(dimension_semantics=("parallel",)),
    )(x2d, wc, wt, biases)

    # un-block to the channel-major layout the PyTorch module returns
    y = (out2d.reshape(n_blk, T, nb, C_out, V)
              .transpose(0, 2, 3, 1, 4)
              .reshape(n_pad, C_out, T, V)[:N]
              .astype(jnp.float32))
    return y


def st_gcn_reference(x, A, p, *, Kt=3):
    """Pure-JAX f32 reference with the same math (for verification)."""
    N, C_in, T, V = x.shape
    K = A.shape[0]
    C_out = p["W_tcn"].shape[1]
    pad = (Kt - 1) // 2

    g = jnp.einsum('oc,nctv->notv', p["W_gcn"], x) + p["b_gcn"][None, :, None, None]
    g = g.reshape(N, K, C_out, T, V)
    z = jnp.einsum('nkctv,kvw->nctw', g, A)

    s1, b1 = _bn_fold(p["bn1_gamma"], p["bn1_beta"], p["bn1_mean"], p["bn1_var"])
    h = jax.nn.relu(z * s1[None, :, None, None] + b1[None, :, None, None])

    hp = jnp.pad(h, ((0, 0), (0, 0), (pad, pad), (0, 0)))
    tc = jnp.zeros((N, C_out, T, V), x.dtype) + p["b_tcn"][None, :, None, None]
    for dt in range(Kt):
        tc = tc + jnp.einsum('oc,nctv->notv', p["W_tcn"][dt], hp[:, :, dt:dt + T, :])

    s2, b2 = _bn_fold(p["bn2_gamma"], p["bn2_beta"], p["bn2_mean"], p["bn2_var"])
    tc = tc * s2[None, :, None, None] + b2[None, :, None, None]

    r = jnp.einsum('oc,nctv->notv', p["W_res"], x) + p["b_res"][None, :, None, None]
    sr, br = _bn_fold(p["bnr_gamma"], p["bnr_beta"], p["bnr_mean"], p["bnr_var"])
    r = r * sr[None, :, None, None] + br[None, :, None, None]

    return jax.nn.relu(tc + r)


if __name__ == "__main__":
    N, C_in, C_out, T, V = 2, 4, 8, 8, 16
    K, Kt = 3, 3

    keys = jax.random.split(jax.random.PRNGKey(0), 24)
    nrm = lambda i, shape, s=1.0: s * jax.random.normal(keys[i], shape, jnp.float32)

    x = nrm(0, (N, C_in, T, V))
    A = nrm(1, (K, V, V), 0.3)

    params = {
        "W_gcn": nrm(2, (K * C_out, C_in), 0.2),
        "b_gcn": nrm(3, (K * C_out,), 0.1),
        "W_tcn": nrm(4, (Kt, C_out, C_out), 0.2),   # [tap, out, in]
        "b_tcn": nrm(5, (C_out,), 0.1),
        "W_res": nrm(6, (C_out, C_in), 0.2),
        "b_res": nrm(7, (C_out,), 0.1),
        "bn1_gamma": 1.0 + nrm(8, (C_out,), 0.1),
        "bn1_beta": nrm(9, (C_out,), 0.1),
        "bn1_mean": nrm(10, (C_out,), 0.1),
        "bn1_var": 1.0 + 0.5 * jax.random.uniform(keys[11], (C_out,), jnp.float32),
        "bn2_gamma": 1.0 + nrm(12, (C_out,), 0.1),
        "bn2_beta": nrm(13, (C_out,), 0.1),
        "bn2_mean": nrm(14, (C_out,), 0.1),
        "bn2_var": 1.0 + 0.5 * jax.random.uniform(keys[15], (C_out,), jnp.float32),
        "bnr_gamma": 1.0 + nrm(16, (C_out,), 0.1),
        "bnr_beta": nrm(17, (C_out,), 0.1),
        "bnr_mean": nrm(18, (C_out,), 0.1),
        "bnr_var": 1.0 + 0.5 * jax.random.uniform(keys[19], (C_out,), jnp.float32),
    }

    y = jax.jit(st_gcn_forward)(x, A, params)
    jax.block_until_ready(y)

    y_ref = st_gcn_reference(x, A, params, Kt=Kt)
    assert y.shape == (N, C_out, T, V)
    # bf16 activations/weights/output with f32 accumulation -> bf16-level tolerance vs f32 ref
    err = float(jnp.max(jnp.abs(y - y_ref)))
    assert jnp.allclose(y, y_ref, atol=1e-1, rtol=1e-1), err

    print("KERNEL_OK")
</pallas_src>

<mosaic_0001>
module attributes {stable_mosaic.version = 11 : i64} {
  func.func @_st_gcn_kernel(%arg0: i32, %arg1: memref<64x64xbf16, #tpu.memory_space<vmem>>, %arg2: memref<64x256xbf16, #tpu.memory_space<vmem>>, %arg3: memref<128x384xbf16, #tpu.memory_space<vmem>>, %arg4: memref<2x128xf32, #tpu.memory_space<vmem>>, %arg5: memref<64x128xbf16, #tpu.memory_space<vmem>>, %arg6: memref<80x128xbf16, #tpu.memory_space<vmem>>) attributes {dimension_semantics = [#tpu.dimension_semantics<parallel>], iteration_bounds = array<i64: 1>, scalar_prefetch = 0 : i64, scratch_operands = 1 : i64, tpu.core_type = #tpu.core_type<tc>, window_params = [{transform_indices = @transform_0, window_bounds = array<i64: 64, 64>}, {pipeline_mode = #tpu.pipeline_mode<synchronous>, transform_indices = @transform_1, window_bounds = array<i64: 64, 256>}, {pipeline_mode = #tpu.pipeline_mode<synchronous>, transform_indices = @transform_2, window_bounds = array<i64: 128, 384>}, {pipeline_mode = #tpu.pipeline_mode<synchronous>, transform_indices = @transform_3, window_bounds = array<i64: 2, 128>}, {transform_indices = @transform_4, window_bounds = array<i64: 64, 128>}]} {
    %c0 = arith.constant 0 : index
    %c0_0 = arith.constant 0 : index
    %0 = vector.load %arg1[%c0, %c0_0] : memref<64x64xbf16, #tpu.memory_space<vmem>>, vector<64x64xbf16>
    %c0_1 = arith.constant 0 : index
    %c0_2 = arith.constant 0 : index
    %1 = vector.load %arg2[%c0_1, %c0_2] : memref<64x256xbf16, #tpu.memory_space<vmem>>, vector<64x256xbf16>
    %cst = arith.constant dense<0.000000e+00> : vector<64x256xf32>
    %2 = tpu.matmul %0, %1, %cst {dimension_numbers = #tpu.dot_dimension_numbers<[1], [0], [0], [1], [0, 0, 1, 1], [], []>} : vector<64x64xbf16>, vector<64x256xbf16>, vector<64x256xf32> -> vector<64x256xf32>
    %3 = vector.extract_strided_slice %2 {offsets = [0, 0], sizes = [64, 128], strides = [1, 1]} : vector<64x256xf32> to vector<64x128xf32>
    %c0_3 = arith.constant 0 : index
    %c0_4 = arith.constant 0 : index
    %4 = vector.load %arg4[%c0_3, %c0_4] : memref<2x128xf32, #tpu.memory_space<vmem>>, vector<1x128xf32>
    %5 = vector.broadcast %4 : vector<1x128xf32> to vector<64x128xf32>
    %6 = arith.addf %3, %5 : vector<64x128xf32>
    %cst_5 = arith.constant 0.000000e+00 : f32
    %7 = vector.broadcast %cst_5 : f32 to vector<64x128xf32>
    %8 = arith.maximumf %6, %7 : vector<64x128xf32>
    %9 = vector.extract_strided_slice %2 {offsets = [0, 128], sizes = [64, 128], strides = [1, 1]} : vector<64x256xf32> to vector<64x128xf32>
    %c1 = arith.constant 1 : index
    %c0_6 = arith.constant 0 : index
    %10 = vector.load %arg4[%c1, %c0_6] : memref<2x128xf32, #tpu.memory_space<vmem>>, vector<1x128xf32>
    %11 = vector.broadcast %10 : vector<1x128xf32> to vector<64x128xf32>
    %12 = arith.addf %9, %11 : vector<64x128xf32>
    %cst_7 = arith.constant 0.000000e+00 : bf16
    %13 = vector.broadcast %cst_7 : bf16 to vector<8x128xbf16>
    %c0_8 = arith.constant 0 : index
    %c0_9 = arith.constant 0 : index
    %14 = vector.load %arg6[%c0_8, %c0_9] : memref<80x128xbf16, #tpu.memory_space<vmem>>, vector<8x128xbf16>
    tpu.vector_store %arg6[%c0_8, %c0_9], %13 {strides = array<i32>} : memref<80x128xbf16, #tpu.memory_space<vmem>>, vector<8x128xbf16>,
    %cst_10 = arith.constant 0.000000e+00 : bf16
    %15 = vector.broadcast %cst_10 : bf16 to vector<8x128xbf16>
    %c72 = arith.constant 72 : index
    %c0_11 = arith.constant 0 : index
    %16 = vector.load %arg6[%c72, %c0_11] : memref<80x128xbf16, #tpu.memory_space<vmem>>, vector<8x128xbf16>
    tpu.vector_store %arg6[%c72, %c0_11], %15 {strides = array<i32>} : memref<80x128xbf16, #tpu.memory_space<vmem>>, vector<8x128xbf16>,
    %17 = arith.truncf %8 : vector<64x128xf32> to vector<64x128xbf16>
    %c8 = arith.constant 8 : index
    %c0_12 = arith.constant 0 : index
    %18 = vector.load %arg6[%c8, %c0_12] : memref<80x128xbf16, #tpu.memory_space<vmem>>, vector<64x128xbf16>
    tpu.vector_store %arg6[%c8, %c0_12], %17 {strides = array<i32>} : memref<80x128xbf16, #tpu.memory_space<vmem>>, vector<64x128xbf16>,
    %c0_13 = arith.constant 0 : index
    %c0_14 = arith.constant 0 : index
    %19 = vector.load %arg6[%c0_13, %c0_14] : memref<80x128xbf16, #tpu.memory_space<vmem>>, vector<64x128xbf16>
    %c0_15 = arith.constant 0 : index
    %c0_16 = arith.constant 0 : index
    %20 = vector.load %arg3[%c0_15, %c0_16] : memref<128x384xbf16, #tpu.memory_space<vmem>>, vector<128x128xbf16>
    %cst_17 = arith.constant dense<0.000000e+00> : vector<64x128xf32>
    %21 = tpu.matmul %19, %20, %cst_17 {dimension_numbers = #tpu.dot_dimension_numbers<[1], [0], [0], [1], [0, 0, 1, 1], [], []>} : vector<64x128xbf16>, vector<128x128xbf16>, vector<64x128xf32> -> vector<64x128xf32>
    %22 = arith.addf %12, %21 : vector<64x128xf32>
    %c8_18 = arith.constant 8 : index
    %c0_19 = arith.constant 0 : index
    %23 = vector.load %arg6[%c8_18, %c0_19] : memref<80x128xbf16, #tpu.memory_space<vmem>>, vector<64x128xbf16>
    %c0_20 = arith.constant 0 : index
    %c128 = arith.constant 128 : index
    %24 = vector.load %arg3[%c0_20, %c128] : memref<128x384xbf16, #tpu.memory_space<vmem>>, vector<128x128xbf16>
    %cst_21 = arith.constant dense<0.000000e+00> : vector<64x128xf32>
    %25 = tpu.matmul %23, %24, %cst_21 {dimension_numbers = #tpu.dot_dimension_numbers<[1], [0], [0], [1], [0, 0, 1, 1], [], []>} : vector<64x128xbf16>, vector<128x128xbf16>, vector<64x128xf32> -> vector<64x128xf32>
    %26 = arith.addf %22, %25 : vector<64x128xf32>
    %c16 = arith.constant 16 : index
    %c0_22 = arith.constant 0 : index
    %27 = vector.load %arg6[%c16, %c0_22] : memref<80x128xbf16, #tpu.memory_space<vmem>>, vector<64x128xbf16>
    %c0_23 = arith.constant 0 : index
    %c256 = arith.constant 256 : index
    %28 = vector.load %arg3[%c0_23, %c256] : memref<128x384xbf16, #tpu.memory_space<vmem>>, vector<128x128xbf16>
    %cst_24 = arith.constant dense<0.000000e+00> : vector<64x128xf32>
    %29 = tpu.matmul %27, %28, %cst_24 {dimension_numbers = #tpu.dot_dimension_numbers<[1], [0], [0], [1], [0, 0, 1, 1], [], []>} : vector<64x128xbf16>, vector<128x128xbf16>, vector<64x128xf32> -> vector<64x128xf32>
    %30 = arith.addf %26, %29 : vector<64x128xf32>
    %cst_25 = arith.constant 0.000000e+00 : f32
    %31 = vector.broadcast %cst_25 : f32 to vector<64x128xf32>
    %32 = arith.maximumf %30, %31 : vector<64x128xf32>
    %33 = arith.truncf %32 : vector<64x128xf32> to vector<64x128xbf16>
    %c0_26 = arith.constant 0 : index
    %c0_27 = arith.constant 0 : index
    %34 = vector.load %arg5[%c0_26, %c0_27] : memref<64x128xbf16, #tpu.memory_space<vmem>>, vector<64x128xbf16>
    tpu.vector_store %arg5[%c0_26, %c0_27], %33 {strides = array<i32>} : memref<64x128xbf16, #tpu.memory_space<vmem>>, vector<64x128xbf16>,
    return
  }
  func.func @transform_0(%arg0: i32) -> (i32, i32) {
    %c0_i32 = arith.constant 0 : i32
    %c0_i32_0 = arith.constant 0 : i32
    return %arg0, %c0_i32 : i32, i32
  }
  func.func @transform_1(%arg0: i32) -> (i32, i32) {
    %c0_i32 = arith.constant 0 : i32
    %c0_i32_0 = arith.constant 0 : i32
    %c0_i32_1 = arith.constant 0 : i32
    return %c0_i32, %c0_i32_0 : i32, i32
  }
  func.func @transform_2(%arg0: i32) -> (i32, i32) {
    %c0_i32 = arith.constant 0 : i32
    %c0_i32_0 = arith.constant 0 : i32
    %c0_i32_1 = arith.constant 0 : i32
    return %c0_i32, %c0_i32_0 : i32, i32
  }
  func.func @transform_3(%arg0: i32) -> (i32, i32) {
    %c0_i32 = arith.constant 0 : i32
    %c0_i32_0 = arith.constant 0 : i32
    %c0_i32_1 = arith.constant 0 : i32
    return %c0_i32, %c0_i32_0 : i32, i32
  }
  func.func @transform_4(%arg0: i32) -> (i32, i32) {
    %c0_i32 = arith.constant 0 : i32
    %c0_i32_0 = arith.constant 0 : i32
    return %arg0, %c0_i32 : i32, i32
  }
}

</mosaic_0001>

<llo_original>
// kernel: st_gcn_forward.1
$region0: #{st_gcn_forward.1}
  #allocation0 [shape = 'u32[]', space=smem, size = 0x4, offset = 0x4, fixed_abs, tag = 'smem constant byte address 0x4 - core index']
  #allocation1 [shape = 'u32[144,128]{1,0:T(1,128)}', space=vmem, size = 0x12000, scoped, tag = 'internal scratch']
  #allocation2 [shape = 'bf16[80,128]{1,0:T(16,128)(2,1)}', space=vmem, size = 0x5000, scoped, tag = 'scratch operand']
  %s0 = inlined_call_operand.vmem [shape: bf16[64,64], index: 0, kind: input, shape index: {}]
  %s1 = inlined_call_operand.vmem [shape: bf16[64,256], index: 1, kind: input, shape index: {}]
  %s2 = inlined_call_operand.vmem [shape: bf16[128,384], index: 2, kind: input, shape index: {}]
  %s3 = inlined_call_operand.vmem [shape: f32[2,128], index: 3, kind: input, shape index: {}]
  %s4 = inlined_call_operand.vmem [shape: bf16[64,128], index: 4, kind: output, shape index: {}]
  %s5 = sld [smem:[#allocation0]]
  $region26: #{st_gcn_forward.1} parent=0
    _
  %s7 = ssub.s32 1, %s5
  %s8 = scalar_select 0, %s7, %s5
  // Predicated region
  $region2: #{st_gcn_forward.1} parent=0 // pred_check
    _
  $region3: #{st_gcn_forward.1} parent=0 // pred_check_branch
    %10 = sbr.rel (0) target = $region5
  $region4: #{st_gcn_forward.1} parent=0 // pred_region
    _
  $region5: #{st_gcn_forward.1} parent=0 // pred_fallthru
    _
  // Predicated region
  $region6: #{st_gcn_forward.1} parent=0 // pred_check
    _
  $region7: #{st_gcn_forward.1} parent=0 // pred_check_branch
    %12 = sbr.rel (0) target = $region9
  $region8: #{st_gcn_forward.1} parent=0 // pred_region
    _
  $region9: #{st_gcn_forward.1} parent=0 // pred_fallthru
    _
  // Predicated region
  $region10: #{st_gcn_forward.1} parent=0 // pred_check
    _
  $region11: #{st_gcn_forward.1} parent=0 // pred_check_branch
    %14 = sbr.rel (0) target = $region13
  $region12: #{st_gcn_forward.1} parent=0 // pred_region
    _
  $region13: #{st_gcn_forward.1} parent=0 // pred_fallthru
    _
  // Predicated region
  $region14: #{st_gcn_forward.1} parent=0 // pred_check
    _
  $region15: #{st_gcn_forward.1} parent=0 // pred_check_branch
    %16 = sbr.rel (0) target = $region17
  $region16: #{st_gcn_forward.1} parent=0 // pred_region
    _
  $region17: #{st_gcn_forward.1} parent=0 // pred_fallthru
    _
  %v18 = vld [vmem:[%s0] sm:$0xf]
  %v19 = vld [vmem:[%s0 + $0x4] sm:$0xf]
  %v20 = vld [vmem:[%s0 + $0x8] sm:$0xf]
  %v21 = vld [vmem:[%s0 + $0xc] sm:$0xf]
  %v22 = vld [vmem:[%s0 + $0x10] sm:$0xf]
  %v23 = vld [vmem:[%s0 + $0x14] sm:$0xf]
  %v24 = vld [vmem:[%s0 + $0x18] sm:$0xf]
  %v25 = vld [vmem:[%s0 + $0x1c] sm:$0xf]
  %v26 = vld [vmem:[%s1] sm:$0xff]
  %v27 = vld [vmem:[%s1 + $0x8] sm:$0xff]
  %v28 = vld [vmem:[%s1 + $0x10] sm:$0xff]
  %v29 = vld [vmem:[%s1 + $0x18] sm:$0xff]
  %v30 = vld [vmem:[%s1 + $0x20] sm:$0xff]
  %v31 = vld [vmem:[%s1 + $0x28] sm:$0xff]
  %v32 = vld [vmem:[%s1 + $0x30] sm:$0xff]
  %v33 = vld [vmem:[%s1 + $0x38] sm:$0xff]
  %v42 = vunpack.c.l.b16 %v18
  %v43 = vunpack.c.l.b16 %v19
  %v44 = vunpack.c.l.b16 %v20
  %v45 = vunpack.c.l.b16 %v21
  %v46 = vunpack.c.l.b16 %v22
  %v47 = vunpack.c.l.b16 %v23
  %v48 = vunpack.c.l.b16 %v24
  %v49 = vunpack.c.l.b16 %v25
  %v50 = vpack.c.b16 %v43, %v42
  %v51 = vpack.c.b16 %v45, %v44
  %v52 = vpack.c.b16 %v47, %v46
  %v53 = vpack.c.b16 %v49, %v48
  %v62 = vunpack.c.l.b16 %v26
  %v63 = vunpack.c.h.b16 %v26
  %v64 = vunpack.c.l.b16 %v27
  %v65 = vunpack.c.h.b16 %v27
  %v66 = vunpack.c.l.b16 %v28
  %v67 = vunpack.c.h.b16 %v28
  %v68 = vunpack.c.l.b16 %v29
  %v69 = vunpack.c.h.b16 %v29
  %v70 = vunpack.c.l.b16 %v30
  %v71 = vunpack.c.h.b16 %v30
  %v72 = vunpack.c.l.b16 %v31
  %v73 = vunpack.c.h.b16 %v31
  %v74 = vunpack.c.l.b16 %v32
  %v75 = vunpack.c.h.b16 %v32
  %v76 = vunpack.c.l.b16 %v33
  %v77 = vunpack.c.h.b16 %v33
  %v78 = vpack.c.b16 %v64, %v62
  %v79 = vpack.c.b16 %v65, %v63
  %v80 = vpack.c.b16 %v68, %v66
  %v81 = vpack.c.b16 %v69, %v67
  %v82 = vpack.c.b16 %v72, %v70
  %v83 = vpack.c.b16 %v73, %v71
  %v84 = vpack.c.b16 %v76, %v74
  %v85 = vpack.c.b16 %v77, %v75
  %vm94 = vcmask 523264
  %v96 = vsel %vm94, %v50, 0
  %v99 = vsel %vm94, %v51, 0
  %v102 = vsel %vm94, %v52, 0
  %v105 = vsel %vm94, %v53, 0
  %107 = vmatprep.subr.bf16.mxu0 %v79
  %108 = vmatpush1.bf16.msra.mxu0 %v78
  %109 = vmatprep.subr.bf16.mxu0 %v81
  %110 = vmatpush1.bf16.msra.mxu0 %v80
  %111 = vmatprep.subr.bf16.mxu0 %v83
  %112 = vmatpush1.bf16.msra.mxu0 %v82
  %113 = vmatprep.subr.bf16.mxu0 %v85
  %114 = vmatpush1.bf16.msra.mxu0 %v84
  %115 = vmatprep.subr.bf16.mxu0 0
  %116 = vmatpush1.bf16.msra.mxu0 0
  %117 = vmatprep.subr.bf16.mxu0 0
  %118 = vmatpush1.bf16.msra.mxu0 0
  %119 = vmatprep.subr.bf16.mxu0 0
  %120 = vmatpush1.bf16.msra.mxu0 0
  %121 = vmatprep.subr.bf16.mxu0 0
  %122 = vmatpush1.bf16.msra.mxu0 0
  %123 = vmatprep.subr.bf16.mxu0 0
  %124 = vmatpush1.bf16.msra.mxu0 0
  %125 = vmatprep.subr.bf16.mxu0 0
  %126 = vmatpush1.bf16.msra.mxu0 0
  %127 = vmatprep.subr.bf16.mxu0 0
  %128 = vmatpush1.bf16.msra.mxu0 0
  %129 = vmatprep.subr.bf16.mxu0 0
  %130 = vmatpush1.bf16.msra.mxu0 0
  %131 = vmatprep.subr.bf16.mxu0 0
  %132 = vmatpush1.bf16.msra.mxu0 0
  %133 = vmatprep.subr.bf16.mxu0 0
  %134 = vmatpush1.bf16.msra.mxu0 0
  %135 = vmatprep.subr.bf16.mxu0 0
  %136 = vmatpush1.bf16.msra.mxu0 0
  %137 = vmatprep.subr.bf16.mxu0 0
  %138 = vmatpush1.bf16.msra.mxu0 0
  %139 = vmatprep.mubr.bf16.mxu0 0
  %140 = vmatmul.mubr.bf16.gmra.mrb[0].mxu0 %v96
  %v141 = vpop.f32.mrb[0].mxu0
  %v142 = vadd.f32 0.0, %v141
  %v143 = vpop.f32.mrb[0].mxu0
  %v144 = vadd.f32 0.0, %v143
  %v145 = vpop.f32.mrb[0].mxu0
  %v146 = vadd.f32 0.0, %v145
  %v147 = vpop.f32.mrb[0].mxu0
  %v148 = vadd.f32 0.0, %v147
  %149 = vmatprep.mubr.bf16.mxu0 0
  %150 = vmatmul.mubr.bf16.gmra.mrb[0].mxu0 %v99
  %v151 = vpop.f32.mrb[0].mxu0
  %v152 = vadd.f32 0.0, %v151
  %v153 = vpop.f32.mrb[0].mxu0
  %v154 = vadd.f32 0.0, %v153
  %v155 = vpop.f32.mrb[0].mxu0
  %v156 = vadd.f32 0.0, %v155
  %v157 = vpop.f32.mrb[0].mxu0
  %v158 = vadd.f32 0.0, %v157
  %159 = vmatprep.mubr.bf16.mxu0 0
  %160 = vmatmul.mubr.bf16.gmra.mrb[0].mxu0 %v102
  %v161 = vpop.f32.mrb[0].mxu0
  %v162 = vadd.f32 0.0, %v161
  %v163 = vpop.f32.mrb[0].mxu0
  %v164 = vadd.f32 0.0, %v163
  %v165 = vpop.f32.mrb[0].mxu0
  %v166 = vadd.f32 0.0, %v165
  %v167 = vpop.f32.mrb[0].mxu0
  %v168 = vadd.f32 0.0, %v167
  %169 = vmatprep.mubr.bf16.mxu0 0
  %170 = vmatmul.mubr.bf16.gmra.mrb[0].mxu0 %v105
  %v171 = vpop.f32.mrb[0].mxu0
  %v172 = vadd.f32 0.0, %v171
  %v173 = vpop.f32.mrb[0].mxu0
  %v174 = vadd.f32 0.0, %v173
  %v175 = vpop.f32.mrb[0].mxu0
  %v176 = vadd.f32 0.0, %v175
  %v177 = vpop.f32.mrb[0].mxu0
  %v178 = vadd.f32 0.0, %v177
  %179 = vdwg.mxu0
  %v180 = vld [vmem:[%s3] sm:$0x1]
  %v181 = vlaneseq
  %v182 = vshrl.u32 %v181, 7
  %v183 = vsub.s32 0, %v182
  %v184 = vrot.slane %v180, %v183
  %v185 = vadd.f32 %v142, %v184
  %v186 = vadd.f32 %v146, %v184
  %v187 = vadd.f32 %v152, %v184
  %v188 = vadd.f32 %v156, %v184
  %v189 = vadd.f32 %v162, %v184
  %v190 = vadd.f32 %v166, %v184
  %v191 = vadd.f32 %v172, %v184
  %v192 = vadd.f32 %v176, %v184
  %v193 = vmax.f32 %v185, 0.0
  %v194 = vmax.f32 %v186, 0.0
  %v195 = vmax.f32 %v187, 0.0
  %v196 = vmax.f32 %v188, 0.0
  %v197 = vmax.f32 %v189, 0.0
  %v198 = vmax.f32 %v190, 0.0
  %v199 = vmax.f32 %v191, 0.0
  %v200 = vmax.f32 %v192, 0.0
  %v201 = vld [vmem:[%s3 + $0x1] sm:$0x1]
  %v202 = vlaneseq
  %v203 = vshrl.u32 %v202, 7
  %v204 = vsub.s32 0, %v203
  %v205 = vrot.slane %v201, %v204
  %v206 = vadd.f32 %v144, %v205
  %v207 = vadd.f32 %v148, %v205
  %v208 = vadd.f32 %v154, %v205
  %v209 = vadd.f32 %v158, %v205
  %v210 = vadd.f32 %v164, %v205
  %v211 = vadd.f32 %v168, %v205
  %v212 = vadd.f32 %v174, %v205
  %v213 = vadd.f32 %v178, %v205
  %214 = vst [vmem:[#allocation2] sm:$0xf] 0
  %215 = vst [vmem:[#allocation2 + $0x20] sm:$0xf0] 0
  %v216 = vpack.c.bf16 %v194, %v193
  %v217 = vpack.c.bf16 %v196, %v195
  %v218 = vpack.c.bf16 %v198, %v197
  %v219 = vpack.c.bf16 %v200, %v199
  %vm224 = vcmask 1043456
  %v225 = vrot.slane %v216, 4
  %v226 = vrot.slane %v217, 4
  %v227 = vsel %vm224, %v225, %v226
  %v228 = vrot.slane %v218, 4
  %v229 = vsel %vm224, %v226, %v228
  %v230 = vrot.slane %v219, 4
  %v231 = vsel %vm224, %v228, %v230
  %237 = vst [vmem:[#allocation2] sm:$0xf0] %v225
  %238 = vst [vmem:[#allocation2 + $0x8] sm:$0xff] %v227
  %239 = vst [vmem:[#allocation2 + $0x10] sm:$0xff] %v229
  %240 = vst [vmem:[#allocation2 + $0x18] sm:$0xff] %v231
  %241 = vst [vmem:[#allocation2 + $0x20] sm:$0xf] %v230
  %v242 = vld [vmem:[#allocation2] sm:$0xff]
  %v243 = vld [vmem:[#allocation2 + $0x8] sm:$0xff]
  %v244 = vld [vmem:[#allocation2 + $0x10] sm:$0xff]
  %v245 = vld [vmem:[#allocation2 + $0x18] sm:$0xff]
  %v246 = vld [vmem:[%s2] sm:$0xf]
  %v247 = vld [vmem:[%s2 + $0xc] sm:$0xf]
  %v248 = vld [vmem:[%s2 + $0x18] sm:$0xf]
  %v249 = vld [vmem:[%s2 + $0x24] sm:$0xf]
  %v250 = vld [vmem:[%s2 + $0x30] sm:$0xf]
  %v251 = vld [vmem:[%s2 + $0x3c] sm:$0xf]
  %v252 = vld [vmem:[%s2 + $0x48] sm:$0xf]
  %v253 = vld [vmem:[%s2 + $0x54] sm:$0xf]
  %v254 = vld [vmem:[%s2 + $0x60] sm:$0xf]
  %v255 = vld [vmem:[%s2 + $0x6c] sm:$0xf]
  %v256 = vld [vmem:[%s2 + $0x78] sm:$0xf]
  %v257 = vld [vmem:[%s2 + $0x84] sm:$0xf]
  %v258 = vld [vmem:[%s2 + $0x90] sm:$0xf]
  %v259 = vld [vmem:[%s2 + $0x9c] sm:$0xf]
  %v260 = vld [vmem:[%s2 + $0xa8] sm:$0xf]
  %v261 = vld [vmem:[%s2 + $0xb4] sm:$0xf]
  %v278 = vunpack.c.l.b16 %v246
  %v279 = vunpack.c.l.b16 %v247
  %v280 = vunpack.c.l.b16 %v248
  %v281 = vunpack.c.l.b16 %v249
  %v282 = vunpack.c.l.b16 %v250
  %v283 = vunpack.c.l.b16 %v251
  %v284 = vunpack.c.l.b16 %v252
  %v285 = vunpack.c.l.b16 %v253
  %v286 = vunpack.c.l.b16 %v254
  %v287 = vunpack.c.l.b16 %v255
  %v288 = vunpack.c.l.b16 %v256
  %v289 = vunpack.c.l.b16 %v257
  %v290 = vunpack.c.l.b16 %v258
  %v291 = vunpack.c.l.b16 %v259
  %v292 = vunpack.c.l.b16 %v260
  %v293 = vunpack.c.l.b16 %v261
  %v294 = vpack.c.b16 %v279, %v278
  %v295 = vpack.c.b16 %v281, %v280
  %v296 = vpack.c.b16 %v283, %v282
  %v297 = vpack.c.b16 %v285, %v284
  %v298 = vpack.c.b16 %v287, %v286
  %v299 = vpack.c.b16 %v289, %v288
  %v300 = vpack.c.b16 %v291, %v290
  %v301 = vpack.c.b16 %v293, %v292
  %310 = vmatprep.subr.bf16.mxu0 0
  %311 = vmatpush1.bf16.msra.mxu0 %v294
  %312 = vmatprep.subr.bf16.mxu0 0
  %313 = vmatpush1.bf16.msra.mxu0 %v295
  %314 = vmatprep.subr.bf16.mxu0 0
  %315 = vmatpush1.bf16.msra.mxu0 %v296
  %316 = vmatprep.subr.bf16.mxu0 0
  %317 = vmatpush1.bf16.msra.mxu0 %v297
  %318 = vmatprep.subr.bf16.mxu0 0
  %319 = vmatpush1.bf16.msra.mxu0 %v298
  %320 = vmatprep.subr.bf16.mxu0 0
  %321 = vmatpush1.bf16.msra.mxu0 %v299
  %322 = vmatprep.subr.bf16.mxu0 0
  %323 = vmatpush1.bf16.msra.mxu0 %v300
  %324 = vmatprep.subr.bf16.mxu0 0
  %325 = vmatpush1.bf16.msra.mxu0 %v301
  %326 = vmatprep.subr.bf16.mxu0 0
  %327 = vmatpush1.bf16.msra.mxu0 0
  %328 = vmatprep.subr.bf16.mxu0 0
  %329 = vmatpush1.bf16.msra.mxu0 0
  %330 = vmatprep.subr.bf16.mxu0 0
  %331 = vmatpush1.bf16.msra.mxu0 0
  %332 = vmatprep.subr.bf16.mxu0 0
  %333 = vmatpush1.bf16.msra.mxu0 0
  %334 = vmatprep.subr.bf16.mxu0 0
  %335 = vmatpush1.bf16.msra.mxu0 0
  %336 = vmatprep.subr.bf16.mxu0 0
  %337 = vmatpush1.bf16.msra.mxu0 0
  %338 = vmatprep.subr.bf16.mxu0 0
  %339 = vmatpush1.bf16.msra.mxu0 0
  %340 = vmatprep.subr.bf16.mxu0 0
  %341 = vmatpush1.bf16.msra.mxu0 0
  %342 = vmatprep.mubr.bf16.mxu0 0
  %343 = vmatmul.mubr.bf16.gmra.mrb[0].mxu0 %v242
  %v344 = vpop.f32.mrb[0].mxu0
  %v345 = vadd.f32 0.0, %v344
  %v346 = vpop.f32.mrb[0].mxu0
  %v347 = vpop.f32.mrb[0].mxu0
  %v348 = vadd.f32 0.0, %v347
  %v349 = vpop.f32.mrb[0].mxu0
  %350 = vmatprep.mubr.bf16.mxu0 0
  %351 = vmatmul.mubr.bf16.gmra.mrb[0].mxu0 %v243
  %v352 = vpop.f32.mrb[0].mxu0
  %v353 = vadd.f32 0.0, %v352
  %v354 = vpop.f32.mrb[0].mxu0
  %v355 = vpop.f32.mrb[0].mxu0
  %v356 = vadd.f32 0.0, %v355
  %v357 = vpop.f32.mrb[0].mxu0
  %358 = vmatprep.mubr.bf16.mxu0 0
  %359 = vmatmul.mubr.bf16.gmra.mrb[0].mxu0 %v244
  %v360 = vpop.f32.mrb[0].mxu0
  %v361 = vadd.f32 0.0, %v360
  %v362 = vpop.f32.mrb[0].mxu0
  %v363 = vpop.f32.mrb[0].mxu0
  %v364 = vadd.f32 0.0, %v363
  %v365 = vpop.f32.mrb[0].mxu0
  %366 = vmatprep.mubr.bf16.mxu0 0
  %367 = vmatmul.mubr.bf16.gmra.mrb[0].mxu0 %v245
  %v368 = vpop.f32.mrb[0].mxu0
  %v369 = vadd.f32 0.0, %v368
  %v370 = vpop.f32.mrb[0].mxu0
  %v371 = vpop.f32.mrb[0].mxu0
  %v372 = vadd.f32 0.0, %v371
  %v373 = vpop.f32.mrb[0].mxu0
  %374 = vdwg.mxu0
  %v375 = vadd.f32 %v206, %v345
  %v376 = vadd.f32 %v207, %v348
  %v377 = vadd.f32 %v208, %v353
  %v378 = vadd.f32 %v209, %v356
  %v379 = vadd.f32 %v210, %v361
  %v380 = vadd.f32 %v211, %v364
  %v381 = vadd.f32 %v212, %v369
  %v382 = vadd.f32 %v213, %v372
  %v383 = vld [vmem:[#allocation2] sm:$0xf0]
  %v384 = vld [vmem:[#allocation2 + $0x8] sm:$0xff]
  %v385 = vld [vmem:[#allocation2 + $0x10] sm:$0xff]
  %v386 = vld [vmem:[#allocation2 + $0x18] sm:$0xff]
  %v387 = vld [vmem:[#allocation2 + $0x20] sm:$0xf]
  %v388 = vld [vmem:[%s2 + $0x4] sm:$0xf]
  %v389 = vld [vmem:[%s2 + $0x10] sm:$0xf]
  %v390 = vld [vmem:[%s2 + $0x1c] sm:$0xf]
  %v391 = vld [vmem:[%s2 + $0x28] sm:$0xf]
  %v392 = vld [vmem:[%s2 + $0x34] sm:$0xf]
  %v393 = vld [vmem:[%s2 + $0x40] sm:$0xf]
  %v394 = vld [vmem:[%s2 + $0x4c] sm:$0xf]
  %v395 = vld [vmem:[%s2 + $0x58] sm:$0xf]
  %v396 = vld [vmem:[%s2 + $0x64] sm:$0xf]
  %v397 = vld [vmem:[%s2 + $0x70] sm:$0xf]
  %v398 = vld [vmem:[%s2 + $0x7c] sm:$0xf]
  %v399 = vld [vmem:[%s2 + $0x88] sm:$0xf]
  %v400 = vld [vmem:[%s2 + $0x94] sm:$0xf]
  %v401 = vld [vmem:[%s2 + $0xa0] sm:$0xf]
  %v402 = vld [vmem:[%s2 + $0xac] sm:$0xf]
  %v403 = vld [vmem:[%s2 + $0xb8] sm:$0xf]
  %v409 = vrot.slane %v383, 4
  %v410 = vrot.slane %v384, 4
  %v411 = vsel %vm224, %v409, %v410
  %v412 = vrot.slane %v385, 4
  %v413 = vsel %vm224, %v410, %v412
  %v414 = vrot.slane %v386, 4
  %v415 = vsel %vm224, %v412, %v414
  %v416 = vrot.slane %v387, 4
  %v417 = vsel %vm224, %v414, %v416
  %v438 = vunpack.c.l.b16 %v388
  %v439 = vunpack.c.l.b16 %v389
  %v440 = vunpack.c.l.b16 %v390
  %v441 = vunpack.c.l.b16 %v391
  %v442 = vunpack.c.l.b16 %v392
  %v443 = vunpack.c.l.b16 %v393
  %v444 = vunpack.c.l.b16 %v394
  %v445 = vunpack.c.l.b16 %v395
  %v446 = vunpack.c.l.b16 %v396
  %v447 = vunpack.c.l.b16 %v397
  %v448 = vunpack.c.l.b16 %v398
  %v449 = vunpack.c.l.b16 %v399
  %v450 = vunpack.c.l.b16 %v400
  %v451 = vunpack.c.l.b16 %v401
  %v452 = vunpack.c.l.b16 %v402
  %v453 = vunpack.c.l.b16 %v403
  %v454 = vpack.c.b16 %v439, %v438
  %v455 = vpack.c.b16 %v441, %v440
  %v456 = vpack.c.b16 %v443, %v442
  %v457 = vpack.c.b16 %v445, %v444
  %v458 = vpack.c.b16 %v447, %v446
  %v459 = vpack.c.b16 %v449, %v448
  %v460 = vpack.c.b16 %v451, %v450
  %v461 = vpack.c.b16 %v453, %v452
  %470 = vmatprep.subr.bf16.mxu0 0
  %471 = vmatpush1.bf16.msra.mxu0 %v454
  %472 = vmatprep.subr.bf16.mxu0 0
  %473 = vmatpush1.bf16.msra.mxu0 %v455
  %474 = vmatprep.subr.bf16.mxu0 0
  %475 = vmatpush1.bf16.msra.mxu0 %v456
  %476 = vmatprep.subr.bf16.mxu0 0
  %477 = vmatpush1.bf16.msra.mxu0 %v457
  %478 = vmatprep.subr.bf16.mxu0 0
  %479 = vmatpush1.bf16.msra.mxu0 %v458
  %480 = vmatprep.subr.bf16.mxu0 0
  %481 = vmatpush1.bf16.msra.mxu0 %v459
  %482 = vmatprep.subr.bf16.mxu0 0
  %483 = vmatpush1.bf16.msra.mxu0 %v460
  %484 = vmatprep.subr.bf16.mxu0 0
  %485 = vmatpush1.bf16.msra.mxu0 %v461
  %486 = vmatprep.subr.bf16.mxu0 0
  %487 = vmatpush1.bf16.msra.mxu0 0
  %488 = vmatprep.subr.bf16.mxu0 0
  %489 = vmatpush1.bf16.msra.mxu0 0
  %490 = vmatprep.subr.bf16.mxu0 0
  %491 = vmatpush1.bf16.msra.mxu0 0
  %492 = vmatprep.subr.bf16.mxu0 0
  %493 = vmatpush1.bf16.msra.mxu0 0
  %494 = vmatprep.subr.bf16.mxu0 0
  %495 = vmatpush1.bf16.msra.mxu0 0
  %496 = vmatprep.subr.bf16.mxu0 0
  %497 = vmatpush1.bf16.msra.mxu0 0
  %498 = vmatprep.subr.bf16.mxu0 0
  %499 = vmatpush1.bf16.msra.mxu0 0
  %500 = vmatprep.subr.bf16.mxu0 0
  %501 = vmatpush1.bf16.msra.mxu0 0
  %502 = vmatprep.mubr.bf16.mxu0 0
  %503 = vmatmul.mubr.bf16.gmra.mrb[0].mxu0 %v411
  %v504 = vpop.f32.mrb[0].mxu0
  %v505 = vadd.f32 0.0, %v504
  %v506 = vpop.f32.mrb[0].mxu0
  %v507 = vpop.f32.mrb[0].mxu0
  %v508 = vadd.f32 0.0, %v507
  %v509 = vpop.f32.mrb[0].mxu0
  %510 = vmatprep.mubr.bf16.mxu0 0
  %511 = vmatmul.mubr.bf16.gmra.mrb[0].mxu0 %v413
  %v512 = vpop.f32.mrb[0].mxu0
  %v513 = vadd.f32 0.0, %v512
  %v514 = vpop.f32.mrb[0].mxu0
  %v515 = vpop.f32.mrb[0].mxu0
  %v516 = vadd.f32 0.0, %v515
  %v517 = vpop.f32.mrb[0].mxu0
  %518 = vmatprep.mubr.bf16.mxu0 0
  %519 = vmatmul.mubr.bf16.gmra.mrb[0].mxu0 %v415
  %v520 = vpop.f32.mrb[0].mxu0
  %v521 = vadd.f32 0.0, %v520
  %v522 = vpop.f32.mrb[0].mxu0
  %v523 = vpop.f32.mrb[0].mxu0
  %v524 = vadd.f32 0.0, %v523
  %v525 = vpop.f32.mrb[0].mxu0
  %526 = vmatprep.mubr.bf16.mxu0 0
  %527 = vmatmul.mubr.bf16.gmra.mrb[0].mxu0 %v417
  %v528 = vpop.f32.mrb[0].mxu0
  %v529 = vadd.f32 0.0, %v528
  %v530 = vpop.f32.mrb[0].mxu0
  %v531 = vpop.f32.mrb[0].mxu0
  %v532 = vadd.f32 0.0, %v531
  %v533 = vpop.f32.mrb[0].mxu0
  %534 = vdwg.mxu0
  %v535 = vadd.f32 %v375, %v505
  %v536 = vadd.f32 %v376, %v508
  %v537 = vadd.f32 %v377, %v513
  %v538 = vadd.f32 %v378, %v516
  %v539 = vadd.f32 %v379, %v521
  %v540 = vadd.f32 %v380, %v524
  %v541 = vadd.f32 %v381, %v529
  %v542 = vadd.f32 %v382, %v532
  %v543 = vld [vmem:[#allocation2 + $0x20] sm:$0xff]
  %v544 = vld [vmem:[%s2 + $0x8] sm:$0xf]
  %v545 = vld [vmem:[%s2 + $0x14] sm:$0xf]
  %v546 = vld [vmem:[%s2 + $0x20] sm:$0xf]
  %v547 = vld [vmem:[%s2 + $0x2c] sm:$0xf]
  %v548 = vld [vmem:[%s2 + $0x38] sm:$0xf]
  %v549 = vld [vmem:[%s2 + $0x44] sm:$0xf]
  %v550 = vld [vmem:[%s2 + $0x50] sm:$0xf]
  %v551 = vld [vmem:[%s2 + $0x5c] sm:$0xf]
  %v552 = vld [vmem:[%s2 + $0x68] sm:$0xf]
  %v553 = vld [vmem:[%s2 + $0x74] sm:$0xf]
  %v554 = vld [vmem:[%s2 + $0x80] sm:$0xf]
  %v555 = vld [vmem:[%s2 + $0x8c] sm:$0xf]
  %v556 = vld [vmem:[%s2 + $0x98] sm:$0xf]
  %v557 = vld [vmem:[%s2 + $0xa4] sm:$0xf]
  %v558 = vld [vmem:[%s2 + $0xb0] sm:$0xf]
  %v559 = vld [vmem:[%s2 + $0xbc] sm:$0xf]
  %v576 = vunpack.c.l.b16 %v544
  %v577 = vunpack.c.l.b16 %v545
  %v578 = vunpack.c.l.b16 %v546
  %v579 = vunpack.c.l.b16 %v547
  %v580 = vunpack.c.l.b16 %v548
  %v581 = vunpack.c.l.b16 %v549
  %v582 = vunpack.c.l.b16 %v550
  %v583 = vunpack.c.l.b16 %v551
  %v584 = vunpack.c.l.b16 %v552
  %v585 = vunpack.c.l.b16 %v553
  %v586 = vunpack.c.l.b16 %v554
  %v587 = vunpack.c.l.b16 %v555
  %v588 = vunpack.c.l.b16 %v556
  %v589 = vunpack.c.l.b16 %v557
  %v590 = vunpack.c.l.b16 %v558
  %v591 = vunpack.c.l.b16 %v559
  %v592 = vpack.c.b16 %v577, %v576
  %v593 = vpack.c.b16 %v579, %v578
  %v594 = vpack.c.b16 %v581, %v580
  %v595 = vpack.c.b16 %v583, %v582
  %v596 = vpack.c.b16 %v585, %v584
  %v597 = vpack.c.b16 %v587, %v586
  %v598 = vpack.c.b16 %v589, %v588
  %v599 = vpack.c.b16 %v591, %v590
  %608 = vmatprep.subr.bf16.mxu0 0
  %609 = vmatpush1.bf16.msra.mxu0 %v592
  %610 = vmatprep.subr.bf16.mxu0 0
  %611 = vmatpush1.bf16.msra.mxu0 %v593
  %612 = vmatprep.subr.bf16.mxu0 0
  %613 = vmatpush1.bf16.msra.mxu0 %v594
  %614 = vmatprep.subr.bf16.mxu0 0
  %615 = vmatpush1.bf16.msra.mxu0 %v595
  %616 = vmatprep.subr.bf16.mxu0 0
  %617 = vmatpush1.bf16.msra.mxu0 %v596
  %618 = vmatprep.subr.bf16.mxu0 0
  %619 = vmatpush1.bf16.msra.mxu0 %v597
  %620 = vmatprep.subr.bf16.mxu0 0
  %621 = vmatpush1.bf16.msra.mxu0 %v598
  %622 = vmatprep.subr.bf16.mxu0 0
  %623 = vmatpush1.bf16.msra.mxu0 %v599
  %624 = vmatprep.subr.bf16.mxu0 0
  %625 = vmatpush1.bf16.msra.mxu0 0
  %626 = vmatprep.subr.bf16.mxu0 0
  %627 = vmatpush1.bf16.msra.mxu0 0
  %628 = vmatprep.subr.bf16.mxu0 0
  %629 = vmatpush1.bf16.msra.mxu0 0
  %630 = vmatprep.subr.bf16.mxu0 0
  %631 = vmatpush1.bf16.msra.mxu0 0
  %632 = vmatprep.subr.bf16.mxu0 0
  %633 = vmatpush1.bf16.msra.mxu0 0
  %634 = vmatprep.subr.bf16.mxu0 0
  %635 = vmatpush1.bf16.msra.mxu0 0
  %636 = vmatprep.subr.bf16.mxu0 0
  %637 = vmatpush1.bf16.msra.mxu0 0
  %638 = vmatprep.subr.bf16.mxu0 0
  %639 = vmatpush1.bf16.msra.mxu0 0
  %640 = vmatprep.mubr.bf16.mxu0 0
  %641 = vmatmul.mubr.bf16.gmra.mrb[0].mxu0 %v384
  %v642 = vpop.f32.mrb[0].mxu0
  %v643 = vadd.f32 0.0, %v642
  %v644 = vpop.f32.mrb[0].mxu0
  %v645 = vpop.f32.mrb[0].mxu0
  %v646 = vadd.f32 0.0, %v645
  %v647 = vpop.f32.mrb[0].mxu0
  %648 = vmatprep.mubr.bf16.mxu0 0
  %649 = vmatmul.mubr.bf16.gmra.mrb[0].mxu0 %v385
  %v650 = vpop.f32.mrb[0].mxu0
  %v651 = vadd.f32 0.0, %v650
  %v652 = vpop.f32.mrb[0].mxu0
  %v653 = vpop.f32.mrb[0].mxu0
  %v654 = vadd.f32 0.0, %v653
  %v655 = vpop.f32.mrb[0].mxu0
  %656 = vmatprep.mubr.bf16.mxu0 0
  %657 = vmatmul.mubr.bf16.gmra.mrb[0].mxu0 %v386
  %v658 = vpop.f32.mrb[0].mxu0
  %v659 = vadd.f32 0.0, %v658
  %v660 = vpop.f32.mrb[0].mxu0
  %v661 = vpop.f32.mrb[0].mxu0
  %v662 = vadd.f32 0.0, %v661
  %v663 = vpop.f32.mrb[0].mxu0
  %664 = vmatprep.mubr.bf16.mxu0 0
  %665 = vmatmul.mubr.bf16.gmra.mrb[0].mxu0 %v543
  %v666 = vpop.f32.mrb[0].mxu0
  %v667 = vadd.f32 0.0, %v666
  %v668 = vpop.f32.mrb[0].mxu0
  %v669 = vpop.f32.mrb[0].mxu0
  %v670 = vadd.f32 0.0, %v669
  %v671 = vpop.f32.mrb[0].mxu0
  %672 = vdwg.mxu0
  %v673 = vadd.f32 %v535, %v643
  %v674 = vadd.f32 %v536, %v646
  %v675 = vadd.f32 %v537, %v651
  %v676 = vadd.f32 %v538, %v654
  %v677 = vadd.f32 %v539, %v659
  %v678 = vadd.f32 %v540, %v662
  %v679 = vadd.f32 %v541, %v667
  %v680 = vadd.f32 %v542, %v670
  %v681 = vmax.f32 %v673, 0.0
  %v682 = vmax.f32 %v674, 0.0
  %v683 = vmax.f32 %v675, 0.0
  %v684 = vmax.f32 %v676, 0.0
  %v685 = vmax.f32 %v677, 0.0
  %v686 = vmax.f32 %v678, 0.0
  %v687 = vmax.f32 %v679, 0.0
  %v688 = vmax.f32 %v680, 0.0
  %v689 = vpack.c.bf16 %v682, %v681
  %v690 = vpack.c.bf16 %v684, %v683
  %v691 = vpack.c.bf16 %v686, %v685
  %v692 = vpack.c.bf16 %v688, %v687
  %v697 = vunpack.c.l.b16 %v689
  %v698 = vunpack.c.h.b16 %v689
  %v699 = vunpack.c.l.b16 %v690
  %v700 = vunpack.c.h.b16 %v690
  %v701 = vunpack.c.l.b16 %v691
  %v702 = vunpack.c.h.b16 %v691
  %v703 = vunpack.c.l.b16 %v692
  %v704 = vunpack.c.h.b16 %v692
  %v705 = vpack.c.b16 %v697, %v697
  %v706 = vpack.c.b16 %v698, %v698
  %v707 = vpack.c.b16 %v699, %v699
  %v708 = vpack.c.b16 %v700, %v700
  %v709 = vpack.c.b16 %v701, %v701
  %v710 = vpack.c.b16 %v702, %v702
  %v711 = vpack.c.b16 %v703, %v703
  %v712 = vpack.c.b16 %v704, %v704
  %721 = vst [vmem:[%s4] sm:$0xf] %v705
  %722 = vst [vmem:[%s4 + $0x4] sm:$0xf] %v706
  %723 = vst [vmem:[%s4 + $0x8] sm:$0xf] %v707
  %724 = vst [vmem:[%s4 + $0xc] sm:$0xf] %v708
  %725 = vst [vmem:[%s4 + $0x10] sm:$0xf] %v709
  %726 = vst [vmem:[%s4 + $0x14] sm:$0xf] %v710
  %727 = vst [vmem:[%s4 + $0x18] sm:$0xf] %v711
  %728 = vst [vmem:[%s4 + $0x1c] sm:$0xf] %v712
  // Predicated region
  $region18: #{st_gcn_forward.1} parent=0 // pred_check
    _
  $region19: #{st_gcn_forward.1} parent=0 // pred_check_branch
    %730 = sbr.rel (0) target = $region21
  $region20: #{st_gcn_forward.1} parent=0 // pred_region
    _
  $region21: #{st_gcn_forward.1} parent=0 // pred_fallthru
    _
  // Predicated region
  $region22: #{st_gcn_forward.1} parent=0 // pred_check
    _
  $region23: #{st_gcn_forward.1} parent=0 // pred_check_branch
    %732 = sbr.rel (0) target = $region25
  $region24: #{st_gcn_forward.1} parent=0 // pred_region
    _
  $region25: #{st_gcn_forward.1} parent=0 // pred_fallthru
    _

</llo_original>
